<compile_context>
chip_gen: v7x
topology: tpu7x:2x2x1
jax: 0.10.0
libtpu: 0.0.40
codegen_flags: <defaults>
</compile_context>

<pallas_src>
import jax
import jax.numpy as jnp
from jax.experimental import pallas as pl
from jax.experimental.pallas import tpu as pltpu

LANE = 128
SUBLANE = 8
HIDDEN = 64
TILE_M_MAX = 512


def _round_up(n, m):
    return ((n + m - 1) // m) * m


def mlp_kernel(x_ref, w1_ref, w2_ref, w3_ref, b_ref, o_ref):
    """One batch tile of the 3-layer MLP.

    x_ref : (TILE_M, IN)      bf16, tiled over the batch grid
    wN_ref: (K, N_padded)     bf16, resident across grid steps
    b_ref : (3, N_padded)     f32, rows = [b1, b2, b3], zero padded, resident
    o_ref : (TILE_M, N_padded) f32
    """
    b = b_ref[...]

    h1 = jnp.dot(x_ref[...], w1_ref[...], preferred_element_type=jnp.float32)
    h1 = jnp.maximum(h1 + b[0:1, :], 0.0)

    h2 = jnp.dot(h1.astype(w2_ref.dtype), w2_ref[...],
                 preferred_element_type=jnp.float32)
    h2 = jnp.maximum(h2 + b[1:2, :], 0.0)

    h3 = jnp.dot(h2.astype(w3_ref.dtype), w3_ref[...],
                 preferred_element_type=jnp.float32)
    o_ref[...] = (h3 + b[2:3, :]).astype(o_ref.dtype)


def prepare_params(params, compute_dtype=jnp.bfloat16):
    """One-time conversion of PyTorch-layout params (W:(out,in), b:(out,)) into
    the pre-transposed, 128-lane-padded, bf16 layout the kernel expects."""
    in_dim = params["w1"].shape[1]
    out_dim = params["w3"].shape[0]
    n_p = _round_up(max(HIDDEN, out_dim), LANE)  # padded feature width (128)

    def pad_wT(w, rows, cols):
        wt = w.T.astype(jnp.float32)  # (in, out)
        full = jnp.zeros((rows, cols), jnp.float32)
        full = full.at[: wt.shape[0], : wt.shape[1]].set(wt)
        return full.astype(compute_dtype)

    w1 = pad_wT(params["w1"], in_dim, n_p)
    w2 = pad_wT(params["w2"], n_p, n_p)
    w3 = pad_wT(params["w3"], n_p, n_p)

    b = jnp.zeros((3, n_p), jnp.float32)
    b = b.at[0, :HIDDEN].set(params["b1"].astype(jnp.float32))
    b = b.at[1, :HIDDEN].set(params["b2"].astype(jnp.float32))
    b = b.at[2, :out_dim].set(params["b3"].astype(jnp.float32))

    return {"w1": w1, "w2": w2, "w3": w3, "b": b,
            "in_dim": int(in_dim), "out_dim": int(out_dim), "n_p": int(n_p)}


def simple_nn_forward(x, prep):
    """x: (batch, in_dim) f32.  prep: output of prepare_params."""
    in_dim, out_dim, n_p = prep["in_dim"], prep["out_dim"], prep["n_p"]
    w1, w2, w3, b = prep["w1"], prep["w2"], prep["w3"], prep["b"]
    batch = x.shape[0]

    # Batch tile: largest that keeps (8, *) sublane alignment; cap at 512.
    if batch >= TILE_M_MAX:
        tile_m = TILE_M_MAX
    else:
        tile_m = max(SUBLANE, _round_up(batch, SUBLANE))
    padded_batch = _round_up(batch, tile_m)

    x_p = x.astype(w1.dtype)
    if padded_batch != batch:
        x_p = jnp.pad(x_p, ((0, padded_batch - batch), (0, 0)))

    grid = (padded_batch // tile_m,)

    flops = 2 * padded_batch * (in_dim * n_p + n_p * n_p + n_p * n_p)
    bytes_accessed = (
        x_p.size * x_p.dtype.itemsize
        + sum(a.size * a.dtype.itemsize for a in (w1, w2, w3, b))
        + padded_batch * n_p * 4
    )

    out_p = pl.pallas_call(
        mlp_kernel,
        out_shape=jax.ShapeDtypeStruct((padded_batch, n_p), jnp.float32),
        grid=grid,
        in_specs=[
            pl.BlockSpec((tile_m, in_dim), lambda i: (i, 0)),  # x: tiled over batch
            pl.BlockSpec(w1.shape, lambda i: (0, 0)),          # weights resident
            pl.BlockSpec(w2.shape, lambda i: (0, 0)),
            pl.BlockSpec(w3.shape, lambda i: (0, 0)),
            pl.BlockSpec(b.shape, lambda i: (0, 0)),           # fused biases
        ],
        out_specs=pl.BlockSpec((tile_m, n_p), lambda i: (i, 0)),
        compiler_params=pltpu.CompilerParams(
            dimension_semantics=("parallel",)),
        cost_estimate=pl.CostEstimate(
            flops=flops, transcendentals=0, bytes_accessed=bytes_accessed),
    )(x_p, w1, w2, w3, b)

    # Slice away batch padding and the 128-lane feature padding.
    return out_p[:batch, :out_dim]


def init_params(key, in_dim, out_dim, hidden=HIDDEN):
    """Deterministic init mimicking nn.Linear default (uniform +-1/sqrt(fan_in)),
    kept in PyTorch layout (W:(out,in), b:(out,))."""
    keys = jax.random.split(key, 6)

    def linear_init(kw, kb, fan_in, fan_out):
        bound = 1.0 / jnp.sqrt(float(fan_in))
        w = jax.random.uniform(kw, (fan_out, fan_in), jnp.float32, -bound, bound)
        b = jax.random.uniform(kb, (fan_out,), jnp.float32, -bound, bound)
        return w, b

    w1, b1 = linear_init(keys[0], keys[1], in_dim, hidden)
    w2, b2 = linear_init(keys[2], keys[3], hidden, hidden)
    w3, b3 = linear_init(keys[4], keys[5], hidden, out_dim)
    return {"w1": w1, "b1": b1, "w2": w2, "b2": b2, "w3": w3, "b3": b3}


def reference_forward(x, params):
    h1 = jnp.maximum(x @ params["w1"].T + params["b1"], 0.0)
    h2 = jnp.maximum(h1 @ params["w2"].T + params["b2"], 0.0)
    return h2 @ params["w3"].T + params["b3"]


if __name__ == "__main__":
    key = jax.random.PRNGKey(0)
    k_param, k_x = jax.random.split(key)

    batch, in_dim, out_dim = 8, 32, 16
    params = init_params(k_param, in_dim, out_dim)
    prep = prepare_params(params)          # one-time layout conversion
    x = jax.random.normal(k_x, (batch, in_dim), jnp.float32)

    out = simple_nn_forward(x, prep)
    out = jax.block_until_ready(out)

    ref = reference_forward(x, params)      # f32 reference
    assert out.shape == (batch, out_dim)
    # bf16 MXU inputs with f32 accumulation -> relaxed tolerance vs f32 reference.
    assert jnp.allclose(out, ref, atol=2e-2, rtol=2e-2), (
        float(jnp.max(jnp.abs(out - ref))))

    print("KERNEL_OK")
</pallas_src>

<mosaic_0001>
module attributes {stable_mosaic.version = 11 : i64} {
  func.func @mlp_kernel(%arg0: i32, %arg1: memref<8x32xbf16, #tpu.memory_space<vmem>>, %arg2: memref<32x128xbf16, #tpu.memory_space<vmem>>, %arg3: memref<128x128xbf16, #tpu.memory_space<vmem>>, %arg4: memref<128x128xbf16, #tpu.memory_space<vmem>>, %arg5: memref<3x128xf32, #tpu.memory_space<vmem>>, %arg6: memref<8x128xf32, #tpu.memory_space<vmem>>) attributes {dimension_semantics = [#tpu.dimension_semantics<parallel>], iteration_bounds = array<i64: 1>, scalar_prefetch = 0 : i64, scratch_operands = 0 : i64, tpu.core_type = #tpu.core_type<tc>, window_params = [{transform_indices = @transform_0, window_bounds = array<i64: 8, 32>}, {pipeline_mode = #tpu.pipeline_mode<synchronous>, transform_indices = @transform_1, window_bounds = array<i64: 32, 128>}, {pipeline_mode = #tpu.pipeline_mode<synchronous>, transform_indices = @transform_2, window_bounds = array<i64: 128, 128>}, {pipeline_mode = #tpu.pipeline_mode<synchronous>, transform_indices = @transform_3, window_bounds = array<i64: 128, 128>}, {pipeline_mode = #tpu.pipeline_mode<synchronous>, transform_indices = @transform_4, window_bounds = array<i64: 3, 128>}, {transform_indices = @transform_5, window_bounds = array<i64: 8, 128>}]} {
    %c0 = arith.constant 0 : index
    %c0_0 = arith.constant 0 : index
    %0 = vector.load %arg5[%c0, %c0_0] : memref<3x128xf32, #tpu.memory_space<vmem>>, vector<3x128xf32>
    %c0_1 = arith.constant 0 : index
    %c0_2 = arith.constant 0 : index
    %1 = vector.load %arg1[%c0_1, %c0_2] : memref<8x32xbf16, #tpu.memory_space<vmem>>, vector<8x32xbf16>
    %c0_3 = arith.constant 0 : index
    %c0_4 = arith.constant 0 : index
    %2 = vector.load %arg2[%c0_3, %c0_4] : memref<32x128xbf16, #tpu.memory_space<vmem>>, vector<32x128xbf16>
    %cst = arith.constant dense<0.000000e+00> : vector<8x128xf32>
    %3 = tpu.matmul %1, %2, %cst {dimension_numbers = #tpu.dot_dimension_numbers<[1], [0], [0], [1], [0, 0, 1, 1], [], []>} : vector<8x32xbf16>, vector<32x128xbf16>, vector<8x128xf32> -> vector<8x128xf32>
    %4 = vector.extract_strided_slice %0 {offsets = [0, 0], sizes = [1, 128], strides = [1, 1]} : vector<3x128xf32> to vector<1x128xf32>
    %5 = vector.broadcast %4 : vector<1x128xf32> to vector<8x128xf32>
    %6 = arith.addf %3, %5 : vector<8x128xf32>
    %cst_5 = arith.constant 0.000000e+00 : f32
    %7 = vector.broadcast %cst_5 : f32 to vector<8x128xf32>
    %8 = arith.maximumf %6, %7 : vector<8x128xf32>
    %9 = arith.truncf %8 : vector<8x128xf32> to vector<8x128xbf16>
    %c0_6 = arith.constant 0 : index
    %c0_7 = arith.constant 0 : index
    %10 = vector.load %arg3[%c0_6, %c0_7] : memref<128x128xbf16, #tpu.memory_space<vmem>>, vector<128x128xbf16>
    %cst_8 = arith.constant dense<0.000000e+00> : vector<8x128xf32>
    %11 = tpu.matmul %9, %10, %cst_8 {dimension_numbers = #tpu.dot_dimension_numbers<[1], [0], [0], [1], [0, 0, 1, 1], [], []>} : vector<8x128xbf16>, vector<128x128xbf16>, vector<8x128xf32> -> vector<8x128xf32>
    %12 = vector.extract_strided_slice %0 {offsets = [1, 0], sizes = [1, 128], strides = [1, 1]} : vector<3x128xf32> to vector<1x128xf32>
    %13 = vector.broadcast %12 : vector<1x128xf32> to vector<8x128xf32>
    %14 = arith.addf %11, %13 : vector<8x128xf32>
    %cst_9 = arith.constant 0.000000e+00 : f32
    %15 = vector.broadcast %cst_9 : f32 to vector<8x128xf32>
    %16 = arith.maximumf %14, %15 : vector<8x128xf32>
    %17 = arith.truncf %16 : vector<8x128xf32> to vector<8x128xbf16>
    %c0_10 = arith.constant 0 : index
    %c0_11 = arith.constant 0 : index
    %18 = vector.load %arg4[%c0_10, %c0_11] : memref<128x128xbf16, #tpu.memory_space<vmem>>, vector<128x128xbf16>
    %cst_12 = arith.constant dense<0.000000e+00> : vector<8x128xf32>
    %19 = tpu.matmul %17, %18, %cst_12 {dimension_numbers = #tpu.dot_dimension_numbers<[1], [0], [0], [1], [0, 0, 1, 1], [], []>} : vector<8x128xbf16>, vector<128x128xbf16>, vector<8x128xf32> -> vector<8x128xf32>
    %20 = vector.extract_strided_slice %0 {offsets = [2, 0], sizes = [1, 128], strides = [1, 1]} : vector<3x128xf32> to vector<1x128xf32>
    %21 = vector.broadcast %20 : vector<1x128xf32> to vector<8x128xf32>
    %22 = arith.addf %19, %21 : vector<8x128xf32>
    %c0_13 = arith.constant 0 : index
    %c0_14 = arith.constant 0 : index
    %23 = vector.load %arg6[%c0_13, %c0_14] : memref<8x128xf32, #tpu.memory_space<vmem>>, vector<8x128xf32>
    tpu.vector_store %arg6[%c0_13, %c0_14], %22 {strides = array<i32>} : memref<8x128xf32, #tpu.memory_space<vmem>>, vector<8x128xf32>,
    return
  }
  func.func @transform_0(%arg0: i32) -> (i32, i32) {
    %c0_i32 = arith.constant 0 : i32
    %c0_i32_0 = arith.constant 0 : i32
    return %arg0, %c0_i32 : i32, i32
  }
  func.func @transform_1(%arg0: i32) -> (i32, i32) {
    %c0_i32 = arith.constant 0 : i32
    %c0_i32_0 = arith.constant 0 : i32
    %c0_i32_1 = arith.constant 0 : i32
    return %c0_i32, %c0_i32_0 : i32, i32
  }
  func.func @transform_2(%arg0: i32) -> (i32, i32) {
    %c0_i32 = arith.constant 0 : i32
    %c0_i32_0 = arith.constant 0 : i32
    %c0_i32_1 = arith.constant 0 : i32
    return %c0_i32, %c0_i32_0 : i32, i32
  }
  func.func @transform_3(%arg0: i32) -> (i32, i32) {
    %c0_i32 = arith.constant 0 : i32
    %c0_i32_0 = arith.constant 0 : i32
    %c0_i32_1 = arith.constant 0 : i32
    return %c0_i32, %c0_i32_0 : i32, i32
  }
  func.func @transform_4(%arg0: i32) -> (i32, i32) {
    %c0_i32 = arith.constant 0 : i32
    %c0_i32_0 = arith.constant 0 : i32
    %c0_i32_1 = arith.constant 0 : i32
    return %c0_i32, %c0_i32_0 : i32, i32
  }
  func.func @transform_5(%arg0: i32) -> (i32, i32) {
    %c0_i32 = arith.constant 0 : i32
    %c0_i32_0 = arith.constant 0 : i32
    return %arg0, %c0_i32 : i32, i32
  }
}

</mosaic_0001>

<llo_original>
// kernel: tpu_custom_call.1
$region0: #{tpu_custom_call.1}
  #allocation0 [shape = 'u32[]', space=smem, size = 0x4, offset = 0x4, fixed_abs, tag = 'smem constant byte address 0x4 - core index']
  #allocation1 [shape = 'u32[144,128]{1,0:T(1,128)}', space=vmem, size = 0x12000, scoped, tag = 'internal scratch']
  %s0 = inlined_call_operand.hbm [shape: bf16[8,32], index: 0, kind: input, shape index: {}]
  %s1 = inlined_call_operand.hbm [shape: bf16[32,128], index: 1, kind: input, shape index: {}]
  %s2 = inlined_call_operand.hbm [shape: bf16[128,128], index: 2, kind: input, shape index: {}]
  %s3 = inlined_call_operand.hbm [shape: bf16[128,128], index: 3, kind: input, shape index: {}]
  %s4 = inlined_call_operand.vmem [shape: f32[3,128], index: 4, kind: input, shape index: {}]
  %s5 = inlined_call_operand.hbm [shape: f32[8,128], index: 5, kind: output, shape index: {}]
  %s6 = sld [smem:[#allocation0]]
  $region46: #{tpu_custom_call.1} parent=0
    _
  %s8 = ssub.s32 1, %s6
  %s9 = scalar_select 0, %s8, %s6
  $region1: #{tpu_custom_call.1} parent=0
    #allocation2 [shape = 'u8[2048]{0}', space=vmem, size = 0x800, scoped, tag = 'input window, operand 0, single buffered']
    #allocation3 [shape = 's32[1]{0}', space=sflag, size = 0x4, scoped, tag = 'scoped memory for tpu_custom_call.1']
    #allocation4 [shape = 's32[1]{0}', space=sflag, size = 0x4, scoped, tag = 'scoped memory for tpu_custom_call.1']
    #allocation5 [shape = 'u8[8192]{0}', space=vmem, size = 0x2000, scoped, tag = 'input window, operand 1, single buffered']
    #allocation6 [shape = 's32[1]{0}', space=sflag, size = 0x4, scoped, tag = 'scoped memory for tpu_custom_call.1']
    #allocation7 [shape = 'u8[32768]{0}', space=vmem, size = 0x8000, scoped, tag = 'input window, operand 2, single buffered']
    #allocation8 [shape = 'u8[32768]{0}', space=vmem, size = 0x8000, scoped, tag = 'input window, operand 3, single buffered']
    #allocation9 [shape = 's32[1]{0}', space=sflag, size = 0x4, scoped, tag = 'scoped memory for tpu_custom_call.1']
    #allocation10 [shape = 'u8[4096]{0}', space=vmem, size = 0x1000, scoped, tag = 'output window, operand 0, single buffered']
    %10 = vsyncpa [#allocation3], 0
    %11 = vsyncpa [#allocation6], 0
    %12 = vsyncpa [#allocation9], 0
    %13 = vsyncpa [#allocation4], 0
    // Predicated region
    $region2: #{tpu_custom_call.1} parent=1 // pred_check
      _
    $region3: #{tpu_custom_call.1} parent=1 // pred_check_branch
      %15 = sbr.rel (0) target = $region5
    $region4: #{tpu_custom_call.1} parent=1 // pred_region
      %s17 = ssub.s32 64, 64
      %18 = vsyncadd [#allocation3], %s17
      %s20 = sshll.u32 [#allocation2], 4
      %s21 = int_to_ptr.vmem [resolvable:$true] %s20
      %23 = dma.hbm_to_vmem [thread:$0]  %s0, 64, %s21, [#allocation3]
    $region5: #{tpu_custom_call.1} parent=1 // pred_fallthru
      _
    // Predicated region
    $region6: #{tpu_custom_call.1} parent=1 // pred_check
      _
    $region7: #{tpu_custom_call.1} parent=1 // pred_check_branch
      %25 = sbr.rel (0) target = $region9
    $region8: #{tpu_custom_call.1} parent=1 // pred_region
      %s27 = ssub.s32 256, 256
      %28 = vsyncadd [#allocation6], %s27
      %s29 = sshll.u32 [#allocation5], 4
      %s30 = int_to_ptr.vmem [resolvable:$true] %s29
      %35 = dma.hbm_to_vmem [thread:$0]  %s1, 256, %s30, [#allocation6], 64, 64, 4
    $region9: #{tpu_custom_call.1} parent=1 // pred_fallthru
      _
    // Predicated region
    $region10: #{tpu_custom_call.1} parent=1 // pred_check
      _
    $region11: #{tpu_custom_call.1} parent=1 // pred_check_branch
      %37 = sbr.rel (0) target = $region13
    $region12: #{tpu_custom_call.1} parent=1 // pred_region
      %s39 = ssub.s32 1024, 1024
      %40 = vsyncadd [#allocation6], %s39
      %s41 = sshll.u32 [#allocation7], 4
      %s42 = int_to_ptr.vmem [resolvable:$true] %s41
      %47 = dma.hbm_to_vmem [thread:$0]  %s2, 1024, %s42, [#allocation6], 64, 64, 4
    $region13: #{tpu_custom_call.1} parent=1 // pred_fallthru
      _
    // Predicated region
    $region14: #{tpu_custom_call.1} parent=1 // pred_check
      _
    $region15: #{tpu_custom_call.1} parent=1 // pred_check_branch
      %49 = sbr.rel (0) target = $region17
    $region16: #{tpu_custom_call.1} parent=1 // pred_region
      %s51 = ssub.s32 1024, 1024
      %52 = vsyncadd [#allocation9], %s51
      %s53 = sshll.u32 [#allocation8], 4
      %s54 = int_to_ptr.vmem [resolvable:$true] %s53
      %59 = dma.hbm_to_vmem [thread:$0]  %s3, 1024, %s54, [#allocation9], 64, 64, 4
    $region17: #{tpu_custom_call.1} parent=1 // pred_fallthru
      _
    // Predicated region
    $region18: #{tpu_custom_call.1} parent=1 // pred_check
      _
    $region19: #{tpu_custom_call.1} parent=1 // pred_check_branch
      %61 = sbr.rel (0) target = $region21
    $region20: #{tpu_custom_call.1} parent=1 // pred_region
      _
    $region21: #{tpu_custom_call.1} parent=1 // pred_fallthru
      _
    // Predicated region
    $region22: #{tpu_custom_call.1} parent=1 // pred_check
      _
    $region23: #{tpu_custom_call.1} parent=1 // pred_check_branch
      %63 = sbr.rel (0) target = $region25
    $region24: #{tpu_custom_call.1} parent=1 // pred_region
      %64 = dma.done [#allocation3], 64
    $region25: #{tpu_custom_call.1} parent=1 // pred_fallthru
      _
    // Predicated region
    $region26: #{tpu_custom_call.1} parent=1 // pred_check
      _
    $region27: #{tpu_custom_call.1} parent=1 // pred_check_branch
      %66 = sbr.rel (0) target = $region29
    $region28: #{tpu_custom_call.1} parent=1 // pred_region
      %67 = dma.done [#allocation6], 256
    $region29: #{tpu_custom_call.1} parent=1 // pred_fallthru
      _
    // Predicated region
    $region30: #{tpu_custom_call.1} parent=1 // pred_check
      _
    $region31: #{tpu_custom_call.1} parent=1 // pred_check_branch
      %69 = sbr.rel (0) target = $region33
    $region32: #{tpu_custom_call.1} parent=1 // pred_region
      %70 = dma.done [#allocation6], 1024
    $region33: #{tpu_custom_call.1} parent=1 // pred_fallthru
      _
    // Predicated region
    $region34: #{tpu_custom_call.1} parent=1 // pred_check
      _
    $region35: #{tpu_custom_call.1} parent=1 // pred_check_branch
      %72 = sbr.rel (0) target = $region37
    $region36: #{tpu_custom_call.1} parent=1 // pred_region
      %73 = dma.done [#allocation9], 1024
    $region37: #{tpu_custom_call.1} parent=1 // pred_fallthru
      _
    %v75 = vld [vmem:[%s4] sm:$0x7]
    %v76 = vld [vmem:[#allocation2] sm:$0xf]
    %v77 = vld [vmem:[#allocation5] sm:$0xf]
    %v78 = vld [vmem:[#allocation5 + $0x4] sm:$0xf]
    %v79 = vld [vmem:[#allocation5 + $0x8] sm:$0xf]
    %v80 = vld [vmem:[#allocation5 + $0xc] sm:$0xf]
    %v81 = vlaneseq
    %v82 = vshrl.u32 %v81, 7
    %v83 = vsub.s32 0, %v82
    %v84 = vrot.slane %v75, %v83
    %v89 = vunpack.c.l.b16 %v77
    %v90 = vunpack.c.l.b16 %v78
    %v91 = vunpack.c.l.b16 %v79
    %v92 = vunpack.c.l.b16 %v80
    %v93 = vpack.c.b16 %v90, %v89
    %v94 = vpack.c.b16 %v92, %v91
    %vm97 = vcmask 261120
    %v99 = vsel %vm97, %v76, 0
    %101 = vmatprep.subr.bf16.mxu0 0
    %102 = vmatpush1.bf16.msra.mxu0 %v93
    %103 = vmatprep.subr.bf16.mxu0 0
    %104 = vmatpush1.bf16.msra.mxu0 %v94
    %105 = vmatprep.subr.bf16.mxu0 0
    %106 = vmatpush1.bf16.msra.mxu0 0
    %107 = vmatprep.subr.bf16.mxu0 0
    %108 = vmatpush1.bf16.msra.mxu0 0
    %109 = vmatprep.subr.bf16.mxu0 0
    %110 = vmatpush1.bf16.msra.mxu0 0
    %111 = vmatprep.subr.bf16.mxu0 0
    %112 = vmatpush1.bf16.msra.mxu0 0
    %113 = vmatprep.subr.bf16.mxu0 0
    %114 = vmatpush1.bf16.msra.mxu0 0
    %115 = vmatprep.subr.bf16.mxu0 0
    %116 = vmatpush1.bf16.msra.mxu0 0
    %117 = vmatprep.subr.bf16.mxu0 0
    %118 = vmatpush1.bf16.msra.mxu0 0
    %119 = vmatprep.subr.bf16.mxu0 0
    %120 = vmatpush1.bf16.msra.mxu0 0
    %121 = vmatprep.subr.bf16.mxu0 0
    %122 = vmatpush1.bf16.msra.mxu0 0
    %123 = vmatprep.subr.bf16.mxu0 0
    %124 = vmatpush1.bf16.msra.mxu0 0
    %125 = vmatprep.subr.bf16.mxu0 0
    %126 = vmatpush1.bf16.msra.mxu0 0
    %127 = vmatprep.subr.bf16.mxu0 0
    %128 = vmatpush1.bf16.msra.mxu0 0
    %129 = vmatprep.subr.bf16.mxu0 0
    %130 = vmatpush1.bf16.msra.mxu0 0
    %131 = vmatprep.subr.bf16.mxu0 0
    %132 = vmatpush1.bf16.msra.mxu0 0
    %133 = vmatprep.mubr.bf16.mxu0 0
    %134 = vmatmul.mubr.bf16.gmra.mrb[0].mxu0 %v99
    %v135 = vpop.f32.mrb[0].mxu0
    %v136 = vadd.f32 %v84, %v135
    %v137 = vpop.f32.mrb[0].mxu0
    %v138 = vpop.f32.mrb[0].mxu0
    %v139 = vpop.f32.mrb[0].mxu0
    %140 = vdwg.mxu0
    %v141 = vmax.f32 %v136, 0.0
    %v142 = vpack.c.bf16 %v141, %v141
    %v143 = vld [vmem:[#allocation7] sm:$0xf]
    %v144 = vld [vmem:[#allocation7 + $0x4] sm:$0xf]
    %v145 = vld [vmem:[#allocation7 + $0x8] sm:$0xf]
    %v146 = vld [vmem:[#allocation7 + $0xc] sm:$0xf]
    %v147 = vld [vmem:[#allocation7 + $0x10] sm:$0xf]
    %v148 = vld [vmem:[#allocation7 + $0x14] sm:$0xf]
    %v149 = vld [vmem:[#allocation7 + $0x18] sm:$0xf]
    %v150 = vld [vmem:[#allocation7 + $0x1c] sm:$0xf]
    %v151 = vld [vmem:[#allocation7 + $0x20] sm:$0xf]
    %v152 = vld [vmem:[#allocation7 + $0x24] sm:$0xf]
    %v153 = vld [vmem:[#allocation7 + $0x28] sm:$0xf]
    %v154 = vld [vmem:[#allocation7 + $0x2c] sm:$0xf]
    %v155 = vld [vmem:[#allocation7 + $0x30] sm:$0xf]
    %v156 = vld [vmem:[#allocation7 + $0x34] sm:$0xf]
    %v157 = vld [vmem:[#allocation7 + $0x38] sm:$0xf]
    %v158 = vld [vmem:[#allocation7 + $0x3c] sm:$0xf]
    %v159 = vlaneseq
    %v160 = vshrl.u32 %v159, 7
    %v161 = vsub.s32 1, %v160
    %v162 = vrot.slane %v75, %v161
    %v179 = vunpack.c.l.b16 %v143
    %v180 = vunpack.c.l.b16 %v144
    %v181 = vunpack.c.l.b16 %v145
    %v182 = vunpack.c.l.b16 %v146
    %v183 = vunpack.c.l.b16 %v147
    %v184 = vunpack.c.l.b16 %v148
    %v185 = vunpack.c.l.b16 %v149
    %v186 = vunpack.c.l.b16 %v150
    %v187 = vunpack.c.l.b16 %v151
    %v188 = vunpack.c.l.b16 %v152
    %v189 = vunpack.c.l.b16 %v153
    %v190 = vunpack.c.l.b16 %v154
    %v191 = vunpack.c.l.b16 %v155
    %v192 = vunpack.c.l.b16 %v156
    %v193 = vunpack.c.l.b16 %v157
    %v194 = vunpack.c.l.b16 %v158
    %v195 = vpack.c.b16 %v180, %v179
    %v196 = vpack.c.b16 %v182, %v181
    %v197 = vpack.c.b16 %v184, %v183
    %v198 = vpack.c.b16 %v186, %v185
    %v199 = vpack.c.b16 %v188, %v187
    %v200 = vpack.c.b16 %v190, %v189
    %v201 = vpack.c.b16 %v192, %v191
    %v202 = vpack.c.b16 %v194, %v193
    %211 = vmatprep.subr.bf16.mxu0 0
    %212 = vmatpush1.bf16.msra.mxu0 %v195
    %213 = vmatprep.subr.bf16.mxu0 0
    %214 = vmatpush1.bf16.msra.mxu0 %v196
    %215 = vmatprep.subr.bf16.mxu0 0
    %216 = vmatpush1.bf16.msra.mxu0 %v197
    %217 = vmatprep.subr.bf16.mxu0 0
    %218 = vmatpush1.bf16.msra.mxu0 %v198
    %219 = vmatprep.subr.bf16.mxu0 0
    %220 = vmatpush1.bf16.msra.mxu0 %v199
    %221 = vmatprep.subr.bf16.mxu0 0
    %222 = vmatpush1.bf16.msra.mxu0 %v200
    %223 = vmatprep.subr.bf16.mxu0 0
    %224 = vmatpush1.bf16.msra.mxu0 %v201
    %225 = vmatprep.subr.bf16.mxu0 0
    %226 = vmatpush1.bf16.msra.mxu0 %v202
    %227 = vmatprep.subr.bf16.mxu0 0
    %228 = vmatpush1.bf16.msra.mxu0 0
    %229 = vmatprep.subr.bf16.mxu0 0
    %230 = vmatpush1.bf16.msra.mxu0 0
    %231 = vmatprep.subr.bf16.mxu0 0
    %232 = vmatpush1.bf16.msra.mxu0 0
    %233 = vmatprep.subr.bf16.mxu0 0
    %234 = vmatpush1.bf16.msra.mxu0 0
    %235 = vmatprep.subr.bf16.mxu0 0
    %236 = vmatpush1.bf16.msra.mxu0 0
    %237 = vmatprep.subr.bf16.mxu0 0
    %238 = vmatpush1.bf16.msra.mxu0 0
    %239 = vmatprep.subr.bf16.mxu0 0
    %240 = vmatpush1.bf16.msra.mxu0 0
    %241 = vmatprep.subr.bf16.mxu0 0
    %242 = vmatpush1.bf16.msra.mxu0 0
    %243 = vmatprep.mubr.bf16.mxu0 0
    %244 = vmatmul.mubr.bf16.gmra.mrb[0].mxu0 %v142
    %v245 = vpop.f32.mrb[0].mxu0
    %v246 = vadd.f32 %v162, %v245
    %v247 = vpop.f32.mrb[0].mxu0
    %v248 = vpop.f32.mrb[0].mxu0
    %v249 = vpop.f32.mrb[0].mxu0
    %250 = vdwg.mxu0
    %v251 = vmax.f32 %v246, 0.0
    %v252 = vpack.c.bf16 %v251, %v251
    %v253 = vld [vmem:[#allocation8] sm:$0xf]
    %v254 = vld [vmem:[#allocation8 + $0x4] sm:$0xf]
    %v255 = vld [vmem:[#allocation8 + $0x8] sm:$0xf]
    %v256 = vld [vmem:[#allocation8 + $0xc] sm:$0xf]
    %v257 = vld [vmem:[#allocation8 + $0x10] sm:$0xf]
    %v258 = vld [vmem:[#allocation8 + $0x14] sm:$0xf]
    %v259 = vld [vmem:[#allocation8 + $0x18] sm:$0xf]
    %v260 = vld [vmem:[#allocation8 + $0x1c] sm:$0xf]
    %v261 = vld [vmem:[#allocation8 + $0x20] sm:$0xf]
    %v262 = vld [vmem:[#allocation8 + $0x24] sm:$0xf]
    %v263 = vld [vmem:[#allocation8 + $0x28] sm:$0xf]
    %v264 = vld [vmem:[#allocation8 + $0x2c] sm:$0xf]
    %v265 = vld [vmem:[#allocation8 + $0x30] sm:$0xf]
    %v266 = vld [vmem:[#allocation8 + $0x34] sm:$0xf]
    %v267 = vld [vmem:[#allocation8 + $0x38] sm:$0xf]
    %v268 = vld [vmem:[#allocation8 + $0x3c] sm:$0xf]
    %v269 = vlaneseq
    %v270 = vshrl.u32 %v269, 7
    %v271 = vsub.s32 2, %v270
    %v272 = vrot.slane %v75, %v271
    %v289 = vunpack.c.l.b16 %v253
    %v290 = vunpack.c.l.b16 %v254
    %v291 = vunpack.c.l.b16 %v255
    %v292 = vunpack.c.l.b16 %v256
    %v293 = vunpack.c.l.b16 %v257
    %v294 = vunpack.c.l.b16 %v258
    %v295 = vunpack.c.l.b16 %v259
    %v296 = vunpack.c.l.b16 %v260
    %v297 = vunpack.c.l.b16 %v261
    %v298 = vunpack.c.l.b16 %v262
    %v299 = vunpack.c.l.b16 %v263
    %v300 = vunpack.c.l.b16 %v264
    %v301 = vunpack.c.l.b16 %v265
    %v302 = vunpack.c.l.b16 %v266
    %v303 = vunpack.c.l.b16 %v267
    %v304 = vunpack.c.l.b16 %v268
    %v305 = vpack.c.b16 %v290, %v289
    %v306 = vpack.c.b16 %v292, %v291
    %v307 = vpack.c.b16 %v294, %v293
    %v308 = vpack.c.b16 %v296, %v295
    %v309 = vpack.c.b16 %v298, %v297
    %v310 = vpack.c.b16 %v300, %v299
    %v311 = vpack.c.b16 %v302, %v301
    %v312 = vpack.c.b16 %v304, %v303
    %321 = vmatprep.subr.bf16.mxu0 0
    %322 = vmatpush1.bf16.msra.mxu0 %v305
    %323 = vmatprep.subr.bf16.mxu0 0
    %324 = vmatpush1.bf16.msra.mxu0 %v306
    %325 = vmatprep.subr.bf16.mxu0 0
    %326 = vmatpush1.bf16.msra.mxu0 %v307
    %327 = vmatprep.subr.bf16.mxu0 0
    %328 = vmatpush1.bf16.msra.mxu0 %v308
    %329 = vmatprep.subr.bf16.mxu0 0
    %330 = vmatpush1.bf16.msra.mxu0 %v309
    %331 = vmatprep.subr.bf16.mxu0 0
    %332 = vmatpush1.bf16.msra.mxu0 %v310
    %333 = vmatprep.subr.bf16.mxu0 0
    %334 = vmatpush1.bf16.msra.mxu0 %v311
    %335 = vmatprep.subr.bf16.mxu0 0
    %336 = vmatpush1.bf16.msra.mxu0 %v312
    %337 = vmatprep.subr.bf16.mxu0 0
    %338 = vmatpush1.bf16.msra.mxu0 0
    %339 = vmatprep.subr.bf16.mxu0 0
    %340 = vmatpush1.bf16.msra.mxu0 0
    %341 = vmatprep.subr.bf16.mxu0 0
    %342 = vmatpush1.bf16.msra.mxu0 0
    %343 = vmatprep.subr.bf16.mxu0 0
    %344 = vmatpush1.bf16.msra.mxu0 0
    %345 = vmatprep.subr.bf16.mxu0 0
    %346 = vmatpush1.bf16.msra.mxu0 0
    %347 = vmatprep.subr.bf16.mxu0 0
    %348 = vmatpush1.bf16.msra.mxu0 0
    %349 = vmatprep.subr.bf16.mxu0 0
    %350 = vmatpush1.bf16.msra.mxu0 0
    %351 = vmatprep.subr.bf16.mxu0 0
    %352 = vmatpush1.bf16.msra.mxu0 0
    %353 = vmatprep.mubr.bf16.mxu0 0
    %354 = vmatmul.mubr.bf16.gmra.mrb[0].mxu0 %v252
    %v355 = vpop.f32.mrb[0].mxu0
    %v356 = vadd.f32 %v272, %v355
    %v357 = vpop.f32.mrb[0].mxu0
    %v358 = vpop.f32.mrb[0].mxu0
    %v359 = vpop.f32.mrb[0].mxu0
    %360 = vdwg.mxu0
    %361 = vst [vmem:[#allocation10] sm:$0xff] %v356
    // Predicated region
    $region38: #{tpu_custom_call.1} parent=1 // pred_check
      _
    $region39: #{tpu_custom_call.1} parent=1 // pred_check_branch
      %363 = sbr.rel (0) target = $region41
    $region40: #{tpu_custom_call.1} parent=1 // pred_region
      %s365 = ssub.s32 128, 128
      %366 = vsyncadd [#allocation4], %s365
      %s368 = sshll.u32 [#allocation10], 4
      %s369 = int_to_ptr.vmem [resolvable:$true] %s368
      %371 = dma.vmem_to_hbm [thread:$0]  %s369, 128, %s5, [#allocation4]
    $region41: #{tpu_custom_call.1} parent=1 // pred_fallthru
      _
    // Predicated region
    $region42: #{tpu_custom_call.1} parent=1 // pred_check
      _
    $region43: #{tpu_custom_call.1} parent=1 // pred_check_branch
      %373 = sbr.rel (0) target = $region45
    $region44: #{tpu_custom_call.1} parent=1 // pred_region
      %374 = dma.done [#allocation4], 128
    $region45: #{tpu_custom_call.1} parent=1 // pred_fallthru
      _
    %375 = vsyncpa [#allocation3], 1
    %376 = vsyncpa [#allocation6], 1
    %377 = vsyncpa [#allocation9], 1
    %378 = vsyncpa [#allocation4], 1

</llo_original>
